<compile_context>
chip_gen: v7x
topology: tpu7x:2x2x1
jax: 0.10.0
libtpu: 0.0.40
codegen_flags: <defaults>
</compile_context>

<pallas_src>
import functools

import numpy as np
import jax
import jax.numpy as jnp
from jax.experimental import pallas as pl
from jax.experimental.pallas import tpu as pltpu


EPS = 1e-5          # nn.InstanceNorm2d default eps
NEG_SLOPE = 0.2     # LeakyReLU(0.2)


def _leaky_relu(x):
    return jnp.where(x >= 0, x, NEG_SLOPE * x)


def _masked_instance_norm(y, msk, gamma, beta, count):
    """Per-sample, per-channel InstanceNorm on the wide (C, Lg) accumulator.

    msk: (G, Lg) disjoint 0/1 masks of each sample's valid lanes.  Two-pass variance.  Returns
    the normalized activation with junk lanes forced to exactly 0 (scale/shift are 0 there).
    """
    inv_n = 1.0 / count
    scale_b = jnp.zeros_like(y)
    shift_b = jnp.zeros_like(y)
    for g in range(msk.shape[0]):
        m = msk[g:g + 1, :]                                        # (1, Lg)
        mean = jnp.sum(y * m, axis=1, keepdims=True) * inv_n       # (C, 1)
        d = y - mean                                               # junk lanes masked below
        var = jnp.sum(d * d * m, axis=1, keepdims=True) * inv_n    # (C, 1) biased, like PyTorch
        sc = gamma * jax.lax.rsqrt(var + EPS)
        sh = beta - mean * sc
        scale_b = scale_b + sc * m
        shift_b = shift_b + sh * m
    return y * scale_b + shift_b


def _down_res_kernel(xs_ref, w1_ref, w2_ref, par_ref, msk_ref, o_ref, *, Ho, Wo, G):
    """Whole DownResBlock for one group of G samples folded into the lane axis.

    xs_ref : (1, 4*Cin, G*SS)  space-to-depth of the pad-1 input, per-sample stride SS=(Ho+2)*(Wo+2).
    w1_ref : (2*Cout, 4*4*Cin) conv1 taps stacked on the contraction axis; rows [Cout:] are the
             avgpool(3,2,1)-folded 1x1 skip conv.
    w2_ref : (Cout, 9*Cout)    conv2 taps stacked on the contraction axis.
    par_ref: (Cout, 5)         columns = gamma1, beta1, gamma2, beta2, bias_skip.
    msk_ref: (G, Lg)           per-sample valid-lane masks of the wide accumulator.
    o_ref  : (1, Cout, G*Ho*Wo)
    """
    Wp2 = Wo + 2
    SS = (Ho + 2) * Wp2
    L = (Ho - 1) * Wp2 + Wo
    Lg = (G - 1) * SS + L
    cout = w2_ref.shape[0]

    xs = xs_ref[0]                                   # (4*Cin, G*SS)
    msk = msk_ref[...]
    g1, be1 = par_ref[:, 0:1], par_ref[:, 1:2]
    g2, be2 = par_ref[:, 2:3], par_ref[:, 3:4]
    bsk = par_ref[:, 4:5]

    # ---- stage 1: Conv(4,s2,p1) as 2x2 s1 taps on the s2d grid + fused skip, ONE deep dot ----
    rhs1 = jnp.concatenate(
        [xs[:, off:off + Lg] for off in (0, 1, Wp2, Wp2 + 1)], axis=0)     # (4*4Cin, Lg)
    acc = jnp.dot(w1_ref[...], rhs1, preferred_element_type=jnp.float32)   # (2*Cout, Lg)
    y1raw, skraw = acc[:cout], acc[cout:]

    # IN + LReLU with masked stats; junk lanes come out exactly 0.
    y1 = _leaky_relu(_masked_instance_norm(y1raw, msk, g1, be1, Ho * Wo))
    # Single contiguous shift turns the wide accumulator into the zero-padded stage-2 input:
    # valid value (h, w) sits at lane h*Wp2 + w, so +(Wp2+1) puts it at (h+1)*Wp2 + (w+1).
    zpad = jnp.zeros((cout, Wp2 + 1), jnp.float32)
    y1p = jnp.concatenate([zpad, y1, zpad], axis=1)                        # (Cout, G*SS)

    # ---- stage 2: Conv(3,s1,p1) on the padded activation, ONE deep dot ----
    rhs2 = jnp.concatenate(
        [y1p[:, ki * Wp2 + kj:ki * Wp2 + kj + Lg] for ki in range(3) for kj in range(3)],
        axis=0)                                                            # (9*Cout, Lg)
    res = jnp.dot(w2_ref[...], rhs2, preferred_element_type=jnp.float32)   # (Cout, Lg)
    res = _leaky_relu(_masked_instance_norm(res, msk, g2, be2, Ho * Wo))

    # ---- skip epilogue + residual add (still in the wide layout) ----
    out_w = res + _leaky_relu(skraw + bsk)

    # ---- the ONE compaction: gather valid rows into a lane-dense (Cout, G*Ho*Wo) tile ----
    o_ref[0] = jnp.concatenate(
        [out_w[:, g * SS + h * Wp2: g * SS + h * Wp2 + Wo]
         for g in range(G) for h in range(Ho)], axis=1).astype(o_ref.dtype)


@jax.jit
def down_res_block(x, w1, b1, g1, be1, w2, b2, g2, be2, wsk, bsk):
    """DownResBlock forward. x: (N, Cin, H, W) -> (N, Cout, H//2, W//2).

    b1/b2 (ConvBaseBlock conv biases) are accepted for API parity but unused: the InstanceNorm
    that immediately follows each conv cancels them exactly.
    """
    del b1, b2
    N, Cin, H, W = x.shape
    Cout = w1.shape[0]
    assert H % 2 == 0 and W % 2 == 0
    Ho, Wo = H // 2, W // 2
    P = Ho * Wo
    Hp2, Wp2 = Ho + 2, Wo + 2
    SS = Hp2 * Wp2                        # per-sample lane stride (== padded stage-2 grid size)
    Hs, Ws = Ho + 1, Wo + 1               # space-to-depth grid of the pad-1 input
    C1 = 4 * Cin

    # Fold G samples into lanes so the output tile is >=128 lanes wide; the remaining grid over
    # sample groups stays "parallel" (shards across v7x's two TensorCores when N/G > 1).
    G = max(1, min(N, 128 // P))
    while N % G:
        G -= 1
    NG = N // G
    L = (Ho - 1) * Wp2 + Wo
    Lg = (G - 1) * SS + L

    # --- wrapper-side layout glue (~1x input bytes; no K*K im2col blow-up in HBM) ---
    xp = jnp.pad(x, ((0, 0), (0, 0), (1, 1), (1, 1)))
    s2d = xp.reshape(N, Cin, Hs, 2, Ws, 2).transpose(0, 1, 3, 5, 2, 4)     # (N,Cin,2,2,Hs,Ws)
    s2d = s2d.reshape(N, C1, Hs, Ws)
    s2d = jnp.pad(s2d, ((0, 0), (0, 0), (0, Hp2 - Hs), (0, Wp2 - Ws)))     # row stride -> Wp2
    xs = s2d.reshape(N, C1, SS)
    xsg = xs.reshape(NG, G, C1, SS).transpose(0, 2, 1, 3).reshape(NG, C1, G * SS)

    # conv1 (Cout,Cin,4,4) -> taps in the s2d channel order, stacked along the contraction axis.
    w1taps = (w1.reshape(Cout, Cin, 2, 2, 2, 2)
                .transpose(2, 4, 0, 1, 3, 5)             # (ti, tj, Cout, Cin, ri, rj)
                .reshape(4, Cout, C1))
    # skip path: AvgPool2d(3,2,1) (count_include_pad=True -> /9) folded into the 1x1 conv,
    # expressed on the same s2d taps; parity (ti,ri)=(1,1) is outside the 3x3 window.
    m = jnp.array([[1.0, 1.0], [1.0, 0.0]], dtype=x.dtype)   # m[t, r] = 1 iff 2t+r <= 2
    wsk2 = wsk.reshape(Cout, Cin) / 9.0
    wsktaps = (wsk2[None, None, :, :, None, None]
               * m[:, None, None, None, :, None]
               * m[None, :, None, None, None, :]).reshape(4, Cout, C1)
    w1cat = jnp.concatenate([w1taps.transpose(1, 0, 2).reshape(Cout, 4 * C1),
                             wsktaps.transpose(1, 0, 2).reshape(Cout, 4 * C1)], axis=0)

    # conv2 (Cout,Cout,3,3) -> (Cout, 9*Cout) stacked along the contraction axis.
    w2cat = (jnp.transpose(w2, (2, 3, 0, 1)).reshape(9, Cout, Cout)
             .transpose(1, 0, 2).reshape(Cout, 9 * Cout))

    params = jnp.stack([g1, be1, g2, be2, bsk], axis=1)       # (Cout, 5)

    # Per-sample valid-lane masks of the wide accumulator (static, built once at trace time).
    lane = np.arange(Lg)
    hh, ww = (lane % SS) // Wp2, lane % Wp2
    valid = (hh < Ho) & (ww < Wo)
    masks = jnp.asarray(((lane // SS)[None, :] == np.arange(G)[:, None]) & valid[None, :],
                        dtype=x.dtype)                        # (G, Lg)

    flops = 2 * NG * Lg * (2 * Cout * 4 * C1 + Cout * 9 * Cout)
    bytes_accessed = 4 * (xsg.size + w1cat.size + w2cat.size + params.size + masks.size
                          + NG * Cout * G * P)

    out = pl.pallas_call(
        functools.partial(_down_res_kernel, Ho=Ho, Wo=Wo, G=G),
        out_shape=jax.ShapeDtypeStruct((NG, Cout, G * P), x.dtype),
        grid_spec=pltpu.PrefetchScalarGridSpec(
            num_scalar_prefetch=0,
            grid=(NG,),
            in_specs=[
                pl.BlockSpec((1, C1, G * SS), lambda n: (n, 0, 0)),
                pl.BlockSpec((2 * Cout, 4 * C1), lambda n: (0, 0)),
                pl.BlockSpec((Cout, 9 * Cout), lambda n: (0, 0)),
                pl.BlockSpec((Cout, 5), lambda n: (0, 0)),
                pl.BlockSpec((G, Lg), lambda n: (0, 0)),
            ],
            out_specs=pl.BlockSpec((1, Cout, G * P), lambda n: (n, 0, 0)),
        ),
        compiler_params=pltpu.CompilerParams(dimension_semantics=("parallel",)),
        cost_estimate=pl.CostEstimate(flops=flops, transcendentals=2 * N * Cout,
                                      bytes_accessed=int(bytes_accessed)),
    )(xsg, w1cat, w2cat, params, masks)

    # (NG, Cout, G, Ho, Wo) -> NCHW; tiny wrapper-side glue (<= 1x output bytes).
    return (out.reshape(NG, Cout, G, Ho, Wo)
               .transpose(0, 2, 1, 3, 4)
               .reshape(N, Cout, Ho, Wo))


def _reference(x, w1, b1, g1, be1, w2, b2, g2, be2, wsk, bsk):
    """Pure-JAX reference mirroring the PyTorch DownResBlock forward."""
    def conv(v, w, b, stride, pad):
        y = jax.lax.conv_general_dilated(
            v, w, window_strides=(stride, stride),
            padding=((pad, pad), (pad, pad)),
            dimension_numbers=("NCHW", "OIHW", "NCHW"))
        return y + b[None, :, None, None]

    def inorm(y, g, b):
        mean = jnp.mean(y, axis=(2, 3), keepdims=True)
        var = jnp.mean((y - mean) ** 2, axis=(2, 3), keepdims=True)
        return (y - mean) * jax.lax.rsqrt(var + EPS) * g[None, :, None, None] + b[None, :, None, None]

    lrelu = lambda v: jnp.where(v >= 0, v, NEG_SLOPE * v)

    y1 = lrelu(inorm(conv(x, w1, b1, 2, 1), g1, be1))
    res = lrelu(inorm(conv(y1, w2, b2, 1, 1), g2, be2))
    pooled = jax.lax.reduce_window(
        x, 0.0, jax.lax.add, (1, 1, 3, 3), (1, 1, 2, 2),
        padding=((0, 0), (0, 0), (1, 1), (1, 1))) / 9.0          # count_include_pad=True
    skip = lrelu(conv(pooled, wsk, bsk, 1, 0))
    return res + skip


if __name__ == "__main__":
    # DownResBlock(in_channels=4, out_channels=8) on a (2, 4, 16, 16) input.
    N, Cin, H, W = 2, 4, 16, 16
    Cout = 8

    key = jax.random.PRNGKey(0)
    ks = jax.random.split(key, 11)
    x   = jax.random.normal(ks[0], (N, Cin, H, W), dtype=jnp.float32)
    w1  = jax.random.normal(ks[1], (Cout, Cin, 4, 4), dtype=jnp.float32) * 0.1
    b1  = jax.random.normal(ks[2], (Cout,), dtype=jnp.float32) * 0.1
    g1  = 1.0 + 0.1 * jax.random.normal(ks[3], (Cout,), dtype=jnp.float32)
    be1 = 0.1 * jax.random.normal(ks[4], (Cout,), dtype=jnp.float32)
    w2  = jax.random.normal(ks[5], (Cout, Cout, 3, 3), dtype=jnp.float32) * 0.1
    b2  = jax.random.normal(ks[6], (Cout,), dtype=jnp.float32) * 0.1
    g2  = 1.0 + 0.1 * jax.random.normal(ks[7], (Cout,), dtype=jnp.float32)
    be2 = 0.1 * jax.random.normal(ks[8], (Cout,), dtype=jnp.float32)
    wsk = jax.random.normal(ks[9], (Cout, Cin, 1, 1), dtype=jnp.float32) * 0.1
    bsk = jax.random.normal(ks[10], (Cout,), dtype=jnp.float32) * 0.1

    out = down_res_block(x, w1, b1, g1, be1, w2, b2, g2, be2, wsk, bsk)
    out = jax.block_until_ready(out)

    ref = _reference(x, w1, b1, g1, be1, w2, b2, g2, be2, wsk, bsk)
    assert out.shape == (N, Cout, H // 2, W // 2)
    err = float(jnp.max(jnp.abs(out - ref)))
    assert jnp.allclose(out, ref, atol=1e-4, rtol=1e-4), f"mismatch vs reference (max abs err {err})"

    print("KERNEL_OK")
</pallas_src>

<mosaic_0001>
module attributes {stable_mosaic.version = 11 : i64} {
  func.func @_down_res_kernel(%arg0: i32, %arg1: memref<1x16x200xf32, #tpu.memory_space<vmem>>, %arg2: memref<16x64xf32, #tpu.memory_space<vmem>>, %arg3: memref<8x72xf32, #tpu.memory_space<vmem>>, %arg4: memref<8x5xf32, #tpu.memory_space<vmem>>, %arg5: memref<2x178xf32, #tpu.memory_space<vmem>>, %arg6: memref<1x8x128xf32, #tpu.memory_space<vmem>>) attributes {dimension_semantics = [#tpu.dimension_semantics<parallel>], iteration_bounds = array<i64: 1>, scalar_prefetch = 0 : i64, scratch_operands = 0 : i64, tpu.core_type = #tpu.core_type<tc>, window_params = [{transform_indices = @transform_0, window_bounds = array<i64: 1, 16, 200>}, {pipeline_mode = #tpu.pipeline_mode<synchronous>, transform_indices = @transform_1, window_bounds = array<i64: 16, 64>}, {pipeline_mode = #tpu.pipeline_mode<synchronous>, transform_indices = @transform_2, window_bounds = array<i64: 8, 72>}, {pipeline_mode = #tpu.pipeline_mode<synchronous>, transform_indices = @transform_3, window_bounds = array<i64: 8, 5>}, {pipeline_mode = #tpu.pipeline_mode<synchronous>, transform_indices = @transform_4, window_bounds = array<i64: 2, 178>}, {transform_indices = @transform_5, window_bounds = array<i64: 1, 8, 128>}]} {
    %c0 = arith.constant 0 : index
    %c0_0 = arith.constant 0 : index
    %c0_1 = arith.constant 0 : index
    %0 = vector.load %arg1[%c0, %c0_0, %c0_1] : memref<1x16x200xf32, #tpu.memory_space<vmem>>, vector<1x16x200xf32>
    %1 = vector.shape_cast %0 : vector<1x16x200xf32> to vector<16x200xf32>
    %c0_2 = arith.constant 0 : index
    %c0_3 = arith.constant 0 : index
    %2 = vector.load %arg5[%c0_2, %c0_3] : memref<2x178xf32, #tpu.memory_space<vmem>>, vector<2x178xf32>
    %c0_4 = arith.constant 0 : index
    %c0_5 = arith.constant 0 : index
    %3 = vector.load %arg4[%c0_4, %c0_5] : memref<8x5xf32, #tpu.memory_space<vmem>>, vector<8x1xf32>
    %c0_6 = arith.constant 0 : index
    %c1 = arith.constant 1 : index
    %4 = vector.load %arg4[%c0_6, %c1] : memref<8x5xf32, #tpu.memory_space<vmem>>, vector<8x1xf32>
    %c0_7 = arith.constant 0 : index
    %c2 = arith.constant 2 : index
    %5 = vector.load %arg4[%c0_7, %c2] : memref<8x5xf32, #tpu.memory_space<vmem>>, vector<8x1xf32>
    %c0_8 = arith.constant 0 : index
    %c3 = arith.constant 3 : index
    %6 = vector.load %arg4[%c0_8, %c3] : memref<8x5xf32, #tpu.memory_space<vmem>>, vector<8x1xf32>
    %c0_9 = arith.constant 0 : index
    %c4 = arith.constant 4 : index
    %7 = vector.load %arg4[%c0_9, %c4] : memref<8x5xf32, #tpu.memory_space<vmem>>, vector<8x1xf32>
    %8 = vector.extract_strided_slice %1 {offsets = [0, 0], sizes = [16, 178], strides = [1, 1]} : vector<16x200xf32> to vector<16x178xf32>
    %9 = vector.extract_strided_slice %1 {offsets = [0, 1], sizes = [16, 178], strides = [1, 1]} : vector<16x200xf32> to vector<16x178xf32>
    %10 = vector.extract_strided_slice %1 {offsets = [0, 10], sizes = [16, 178], strides = [1, 1]} : vector<16x200xf32> to vector<16x178xf32>
    %11 = vector.extract_strided_slice %1 {offsets = [0, 11], sizes = [16, 178], strides = [1, 1]} : vector<16x200xf32> to vector<16x178xf32>
    %12 = tpu.concatenate %8, %9, %10, %11 in 0 : vector<16x178xf32>, vector<16x178xf32>, vector<16x178xf32>, vector<16x178xf32> -> vector<64x178xf32>
    %c0_10 = arith.constant 0 : index
    %c0_11 = arith.constant 0 : index
    %13 = vector.load %arg2[%c0_10, %c0_11] : memref<16x64xf32, #tpu.memory_space<vmem>>, vector<16x64xf32>
    %cst = arith.constant dense<0.000000e+00> : vector<16x178xf32>
    %14 = tpu.matmul %13, %12, %cst {dimension_numbers = #tpu.dot_dimension_numbers<[1], [0], [0], [1], [0, 0, 1, 1], [], []>} : vector<16x64xf32>, vector<64x178xf32>, vector<16x178xf32> -> vector<16x178xf32>
    %15 = vector.extract_strided_slice %14 {offsets = [0, 0], sizes = [8, 178], strides = [1, 1]} : vector<16x178xf32> to vector<8x178xf32>
    %16 = vector.extract_strided_slice %14 {offsets = [8, 0], sizes = [8, 178], strides = [1, 1]} : vector<16x178xf32> to vector<8x178xf32>
    %cst_12 = arith.constant 0.000000e+00 : f32
    %17 = vector.broadcast %cst_12 : f32 to vector<8x178xf32>
    %cst_13 = arith.constant 0.000000e+00 : f32
    %18 = vector.broadcast %cst_13 : f32 to vector<8x178xf32>
    %19 = vector.extract_strided_slice %2 {offsets = [0, 0], sizes = [1, 178], strides = [1, 1]} : vector<2x178xf32> to vector<1x178xf32>
    %20 = vector.broadcast %19 : vector<1x178xf32> to vector<8x178xf32>
    %21 = arith.mulf %15, %20 : vector<8x178xf32>
    %cst_14 = arith.constant dense<0.000000e+00> : vector<8xf32>
    %22 = vector.multi_reduction <add>, %21, %cst_14 [1] : vector<8x178xf32> to vector<8xf32>
    %23 = vector.shape_cast %22 : vector<8xf32> to vector<8x1xf32>
    %cst_15 = arith.constant 1.562500e-02 : f32
    %24 = vector.broadcast %cst_15 : f32 to vector<8x1xf32>
    %25 = arith.mulf %23, %24 : vector<8x1xf32>
    %26 = vector.broadcast %25 : vector<8x1xf32> to vector<8x178xf32>
    %27 = arith.subf %15, %26 : vector<8x178xf32>
    %28 = arith.mulf %27, %27 : vector<8x178xf32>
    %29 = vector.broadcast %19 : vector<1x178xf32> to vector<8x178xf32>
    %30 = arith.mulf %28, %29 : vector<8x178xf32>
    %cst_16 = arith.constant dense<0.000000e+00> : vector<8xf32>
    %31 = vector.multi_reduction <add>, %30, %cst_16 [1] : vector<8x178xf32> to vector<8xf32>
    %32 = vector.shape_cast %31 : vector<8xf32> to vector<8x1xf32>
    %cst_17 = arith.constant 1.562500e-02 : f32
    %33 = vector.broadcast %cst_17 : f32 to vector<8x1xf32>
    %34 = arith.mulf %32, %33 : vector<8x1xf32>
    %cst_18 = arith.constant 9.99999974E-6 : f32
    %35 = vector.broadcast %cst_18 : f32 to vector<8x1xf32>
    %36 = arith.addf %34, %35 : vector<8x1xf32>
    %37 = math.rsqrt %36 : vector<8x1xf32>
    %38 = arith.mulf %3, %37 : vector<8x1xf32>
    %39 = arith.mulf %25, %38 : vector<8x1xf32>
    %40 = arith.subf %4, %39 : vector<8x1xf32>
    %41 = vector.broadcast %38 : vector<8x1xf32> to vector<8x178xf32>
    %42 = vector.broadcast %19 : vector<1x178xf32> to vector<8x178xf32>
    %43 = arith.mulf %41, %42 : vector<8x178xf32>
    %44 = arith.addf %17, %43 : vector<8x178xf32>
    %45 = vector.broadcast %40 : vector<8x1xf32> to vector<8x178xf32>
    %46 = vector.broadcast %19 : vector<1x178xf32> to vector<8x178xf32>
    %47 = arith.mulf %45, %46 : vector<8x178xf32>
    %48 = arith.addf %18, %47 : vector<8x178xf32>
    %49 = vector.extract_strided_slice %2 {offsets = [1, 0], sizes = [1, 178], strides = [1, 1]} : vector<2x178xf32> to vector<1x178xf32>
    %50 = vector.broadcast %49 : vector<1x178xf32> to vector<8x178xf32>
    %51 = arith.mulf %15, %50 : vector<8x178xf32>
    %cst_19 = arith.constant dense<0.000000e+00> : vector<8xf32>
    %52 = vector.multi_reduction <add>, %51, %cst_19 [1] : vector<8x178xf32> to vector<8xf32>
    %53 = vector.shape_cast %52 : vector<8xf32> to vector<8x1xf32>
    %cst_20 = arith.constant 1.562500e-02 : f32
    %54 = vector.broadcast %cst_20 : f32 to vector<8x1xf32>
    %55 = arith.mulf %53, %54 : vector<8x1xf32>
    %56 = vector.broadcast %55 : vector<8x1xf32> to vector<8x178xf32>
    %57 = arith.subf %15, %56 : vector<8x178xf32>
    %58 = arith.mulf %57, %57 : vector<8x178xf32>
    %59 = vector.broadcast %49 : vector<1x178xf32> to vector<8x178xf32>
    %60 = arith.mulf %58, %59 : vector<8x178xf32>
    %cst_21 = arith.constant dense<0.000000e+00> : vector<8xf32>
    %61 = vector.multi_reduction <add>, %60, %cst_21 [1] : vector<8x178xf32> to vector<8xf32>
    %62 = vector.shape_cast %61 : vector<8xf32> to vector<8x1xf32>
    %cst_22 = arith.constant 1.562500e-02 : f32
    %63 = vector.broadcast %cst_22 : f32 to vector<8x1xf32>
    %64 = arith.mulf %62, %63 : vector<8x1xf32>
    %cst_23 = arith.constant 9.99999974E-6 : f32
    %65 = vector.broadcast %cst_23 : f32 to vector<8x1xf32>
    %66 = arith.addf %64, %65 : vector<8x1xf32>
    %67 = math.rsqrt %66 : vector<8x1xf32>
    %68 = arith.mulf %3, %67 : vector<8x1xf32>
    %69 = arith.mulf %55, %68 : vector<8x1xf32>
    %70 = arith.subf %4, %69 : vector<8x1xf32>
    %71 = vector.broadcast %68 : vector<8x1xf32> to vector<8x178xf32>
    %72 = vector.broadcast %49 : vector<1x178xf32> to vector<8x178xf32>
    %73 = arith.mulf %71, %72 : vector<8x178xf32>
    %74 = arith.addf %44, %73 : vector<8x178xf32>
    %75 = vector.broadcast %70 : vector<8x1xf32> to vector<8x178xf32>
    %76 = vector.broadcast %49 : vector<1x178xf32> to vector<8x178xf32>
    %77 = arith.mulf %75, %76 : vector<8x178xf32>
    %78 = arith.addf %48, %77 : vector<8x178xf32>
    %79 = arith.mulf %15, %74 : vector<8x178xf32>
    %80 = arith.addf %79, %78 : vector<8x178xf32>
    %cst_24 = arith.constant 0.000000e+00 : f32
    %81 = vector.broadcast %cst_24 : f32 to vector<8x178xf32>
    %82 = arith.cmpf oge, %80, %81 : vector<8x178xf32>
    %cst_25 = arith.constant 2.000000e-01 : f32
    %83 = vector.broadcast %cst_25 : f32 to vector<8x178xf32>
    %84 = arith.mulf %83, %80 : vector<8x178xf32>
    %85 = arith.select %82, %80, %84 : vector<8x178xi1>, vector<8x178xf32>
    %cst_26 = arith.constant 0.000000e+00 : f32
    %86 = vector.broadcast %cst_26 : f32 to vector<8x11xf32>
    %87 = tpu.concatenate %86, %85, %86 in 1 : vector<8x11xf32>, vector<8x178xf32>, vector<8x11xf32> -> vector<8x200xf32>
    %88 = vector.extract_strided_slice %87 {offsets = [0, 0], sizes = [8, 178], strides = [1, 1]} : vector<8x200xf32> to vector<8x178xf32>
    %89 = vector.extract_strided_slice %87 {offsets = [0, 1], sizes = [8, 178], strides = [1, 1]} : vector<8x200xf32> to vector<8x178xf32>
    %90 = vector.extract_strided_slice %87 {offsets = [0, 2], sizes = [8, 178], strides = [1, 1]} : vector<8x200xf32> to vector<8x178xf32>
    %91 = vector.extract_strided_slice %87 {offsets = [0, 10], sizes = [8, 178], strides = [1, 1]} : vector<8x200xf32> to vector<8x178xf32>
    %92 = vector.extract_strided_slice %87 {offsets = [0, 11], sizes = [8, 178], strides = [1, 1]} : vector<8x200xf32> to vector<8x178xf32>
    %93 = vector.extract_strided_slice %87 {offsets = [0, 12], sizes = [8, 178], strides = [1, 1]} : vector<8x200xf32> to vector<8x178xf32>
    %94 = vector.extract_strided_slice %87 {offsets = [0, 20], sizes = [8, 178], strides = [1, 1]} : vector<8x200xf32> to vector<8x178xf32>
    %95 = vector.extract_strided_slice %87 {offsets = [0, 21], sizes = [8, 178], strides = [1, 1]} : vector<8x200xf32> to vector<8x178xf32>
    %96 = vector.extract_strided_slice %87 {offsets = [0, 22], sizes = [8, 178], strides = [1, 1]} : vector<8x200xf32> to vector<8x178xf32>
    %97 = tpu.concatenate %88, %89, %90, %91, %92, %93, %94, %95, %96 in 0 : vector<8x178xf32>, vector<8x178xf32>, vector<8x178xf32>, vector<8x178xf32>, vector<8x178xf32>, vector<8x178xf32>, vector<8x178xf32>, vector<8x178xf32>, vector<8x178xf32> -> vector<72x178xf32>
    %c0_27 = arith.constant 0 : index
    %c0_28 = arith.constant 0 : index
    %98 = vector.load %arg3[%c0_27, %c0_28] : memref<8x72xf32, #tpu.memory_space<vmem>>, vector<8x72xf32>
    %cst_29 = arith.constant dense<0.000000e+00> : vector<8x178xf32>
    %99 = tpu.matmul %98, %97, %cst_29 {dimension_numbers = #tpu.dot_dimension_numbers<[1], [0], [0], [1], [0, 0, 1, 1], [], []>} : vector<8x72xf32>, vector<72x178xf32>, vector<8x178xf32> -> vector<8x178xf32>
    %cst_30 = arith.constant 0.000000e+00 : f32
    %100 = vector.broadcast %cst_30 : f32 to vector<8x178xf32>
    %cst_31 = arith.constant 0.000000e+00 : f32
    %101 = vector.broadcast %cst_31 : f32 to vector<8x178xf32>
    %102 = vector.extract_strided_slice %2 {offsets = [0, 0], sizes = [1, 178], strides = [1, 1]} : vector<2x178xf32> to vector<1x178xf32>
    %103 = vector.broadcast %102 : vector<1x178xf32> to vector<8x178xf32>
    %104 = arith.mulf %99, %103 : vector<8x178xf32>
    %cst_32 = arith.constant dense<0.000000e+00> : vector<8xf32>
    %105 = vector.multi_reduction <add>, %104, %cst_32 [1] : vector<8x178xf32> to vector<8xf32>
    %106 = vector.shape_cast %105 : vector<8xf32> to vector<8x1xf32>
    %cst_33 = arith.constant 1.562500e-02 : f32
    %107 = vector.broadcast %cst_33 : f32 to vector<8x1xf32>
    %108 = arith.mulf %106, %107 : vector<8x1xf32>
    %109 = vector.broadcast %108 : vector<8x1xf32> to vector<8x178xf32>
    %110 = arith.subf %99, %109 : vector<8x178xf32>
    %111 = arith.mulf %110, %110 : vector<8x178xf32>
    %112 = vector.broadcast %102 : vector<1x178xf32> to vector<8x178xf32>
    %113 = arith.mulf %111, %112 : vector<8x178xf32>
    %cst_34 = arith.constant dense<0.000000e+00> : vector<8xf32>
    %114 = vector.multi_reduction <add>, %113, %cst_34 [1] : vector<8x178xf32> to vector<8xf32>
    %115 = vector.shape_cast %114 : vector<8xf32> to vector<8x1xf32>
    %cst_35 = arith.constant 1.562500e-02 : f32
    %116 = vector.broadcast %cst_35 : f32 to vector<8x1xf32>
    %117 = arith.mulf %115, %116 : vector<8x1xf32>
    %cst_36 = arith.constant 9.99999974E-6 : f32
    %118 = vector.broadcast %cst_36 : f32 to vector<8x1xf32>
    %119 = arith.addf %117, %118 : vector<8x1xf32>
    %120 = math.rsqrt %119 : vector<8x1xf32>
    %121 = arith.mulf %5, %120 : vector<8x1xf32>
    %122 = arith.mulf %108, %121 : vector<8x1xf32>
    %123 = arith.subf %6, %122 : vector<8x1xf32>
    %124 = vector.broadcast %121 : vector<8x1xf32> to vector<8x178xf32>
    %125 = vector.broadcast %102 : vector<1x178xf32> to vector<8x178xf32>
    %126 = arith.mulf %124, %125 : vector<8x178xf32>
    %127 = arith.addf %100, %126 : vector<8x178xf32>
    %128 = vector.broadcast %123 : vector<8x1xf32> to vector<8x178xf32>
    %129 = vector.broadcast %102 : vector<1x178xf32> to vector<8x178xf32>
    %130 = arith.mulf %128, %129 : vector<8x178xf32>
    %131 = arith.addf %101, %130 : vector<8x178xf32>
    %132 = vector.extract_strided_slice %2 {offsets = [1, 0], sizes = [1, 178], strides = [1, 1]} : vector<2x178xf32> to vector<1x178xf32>
    %133 = vector.broadcast %132 : vector<1x178xf32> to vector<8x178xf32>
    %134 = arith.mulf %99, %133 : vector<8x178xf32>
    %cst_37 = arith.constant dense<0.000000e+00> : vector<8xf32>
    %135 = vector.multi_reduction <add>, %134, %cst_37 [1] : vector<8x178xf32> to vector<8xf32>
    %136 = vector.shape_cast %135 : vector<8xf32> to vector<8x1xf32>
    %cst_38 = arith.constant 1.562500e-02 : f32
    %137 = vector.broadcast %cst_38 : f32 to vector<8x1xf32>
    %138 = arith.mulf %136, %137 : vector<8x1xf32>
    %139 = vector.broadcast %138 : vector<8x1xf32> to vector<8x178xf32>
    %140 = arith.subf %99, %139 : vector<8x178xf32>
    %141 = arith.mulf %140, %140 : vector<8x178xf32>
    %142 = vector.broadcast %132 : vector<1x178xf32> to vector<8x178xf32>
    %143 = arith.mulf %141, %142 : vector<8x178xf32>
    %cst_39 = arith.constant dense<0.000000e+00> : vector<8xf32>
    %144 = vector.multi_reduction <add>, %143, %cst_39 [1] : vector<8x178xf32> to vector<8xf32>
    %145 = vector.shape_cast %144 : vector<8xf32> to vector<8x1xf32>
    %cst_40 = arith.constant 1.562500e-02 : f32
    %146 = vector.broadcast %cst_40 : f32 to vector<8x1xf32>
    %147 = arith.mulf %145, %146 : vector<8x1xf32>
    %cst_41 = arith.constant 9.99999974E-6 : f32
    %148 = vector.broadcast %cst_41 : f32 to vector<8x1xf32>
    %149 = arith.addf %147, %148 : vector<8x1xf32>
    %150 = math.rsqrt %149 : vector<8x1xf32>
    %151 = arith.mulf %5, %150 : vector<8x1xf32>
    %152 = arith.mulf %138, %151 : vector<8x1xf32>
    %153 = arith.subf %6, %152 : vector<8x1xf32>
    %154 = vector.broadcast %151 : vector<8x1xf32> to vector<8x178xf32>
    %155 = vector.broadcast %132 : vector<1x178xf32> to vector<8x178xf32>
    %156 = arith.mulf %154, %155 : vector<8x178xf32>
    %157 = arith.addf %127, %156 : vector<8x178xf32>
    %158 = vector.broadcast %153 : vector<8x1xf32> to vector<8x178xf32>
    %159 = vector.broadcast %132 : vector<1x178xf32> to vector<8x178xf32>
    %160 = arith.mulf %158, %159 : vector<8x178xf32>
    %161 = arith.addf %131, %160 : vector<8x178xf32>
    %162 = arith.mulf %99, %157 : vector<8x178xf32>
    %163 = arith.addf %162, %161 : vector<8x178xf32>
    %cst_42 = arith.constant 0.000000e+00 : f32
    %164 = vector.broadcast %cst_42 : f32 to vector<8x178xf32>
    %165 = arith.cmpf oge, %163, %164 : vector<8x178xf32>
    %cst_43 = arith.constant 2.000000e-01 : f32
    %166 = vector.broadcast %cst_43 : f32 to vector<8x178xf32>
    %167 = arith.mulf %166, %163 : vector<8x178xf32>
    %168 = arith.select %165, %163, %167 : vector<8x178xi1>, vector<8x178xf32>
    %169 = vector.broadcast %7 : vector<8x1xf32> to vector<8x178xf32>
    %170 = arith.addf %16, %169 : vector<8x178xf32>
    %cst_44 = arith.constant 0.000000e+00 : f32
    %171 = vector.broadcast %cst_44 : f32 to vector<8x178xf32>
    %172 = arith.cmpf oge, %170, %171 : vector<8x178xf32>
    %cst_45 = arith.constant 2.000000e-01 : f32
    %173 = vector.broadcast %cst_45 : f32 to vector<8x178xf32>
    %174 = arith.mulf %173, %170 : vector<8x178xf32>
    %175 = arith.select %172, %170, %174 : vector<8x178xi1>, vector<8x178xf32>
    %176 = arith.addf %168, %175 : vector<8x178xf32>
    %177 = vector.extract_strided_slice %176 {offsets = [0, 0], sizes = [8, 8], strides = [1, 1]} : vector<8x178xf32> to vector<8x8xf32>
    %178 = vector.extract_strided_slice %176 {offsets = [0, 10], sizes = [8, 8], strides = [1, 1]} : vector<8x178xf32> to vector<8x8xf32>
    %179 = vector.extract_strided_slice %176 {offsets = [0, 20], sizes = [8, 8], strides = [1, 1]} : vector<8x178xf32> to vector<8x8xf32>
    %180 = vector.extract_strided_slice %176 {offsets = [0, 30], sizes = [8, 8], strides = [1, 1]} : vector<8x178xf32> to vector<8x8xf32>
    %181 = vector.extract_strided_slice %176 {offsets = [0, 40], sizes = [8, 8], strides = [1, 1]} : vector<8x178xf32> to vector<8x8xf32>
    %182 = vector.extract_strided_slice %176 {offsets = [0, 50], sizes = [8, 8], strides = [1, 1]} : vector<8x178xf32> to vector<8x8xf32>
    %183 = vector.extract_strided_slice %176 {offsets = [0, 60], sizes = [8, 8], strides = [1, 1]} : vector<8x178xf32> to vector<8x8xf32>
    %184 = vector.extract_strided_slice %176 {offsets = [0, 70], sizes = [8, 8], strides = [1, 1]} : vector<8x178xf32> to vector<8x8xf32>
    %185 = vector.extract_strided_slice %176 {offsets = [0, 100], sizes = [8, 8], strides = [1, 1]} : vector<8x178xf32> to vector<8x8xf32>
    %186 = vector.extract_strided_slice %176 {offsets = [0, 110], sizes = [8, 8], strides = [1, 1]} : vector<8x178xf32> to vector<8x8xf32>
    %187 = vector.extract_strided_slice %176 {offsets = [0, 120], sizes = [8, 8], strides = [1, 1]} : vector<8x178xf32> to vector<8x8xf32>
    %188 = vector.extract_strided_slice %176 {offsets = [0, 130], sizes = [8, 8], strides = [1, 1]} : vector<8x178xf32> to vector<8x8xf32>
    %189 = vector.extract_strided_slice %176 {offsets = [0, 140], sizes = [8, 8], strides = [1, 1]} : vector<8x178xf32> to vector<8x8xf32>
    %190 = vector.extract_strided_slice %176 {offsets = [0, 150], sizes = [8, 8], strides = [1, 1]} : vector<8x178xf32> to vector<8x8xf32>
    %191 = vector.extract_strided_slice %176 {offsets = [0, 160], sizes = [8, 8], strides = [1, 1]} : vector<8x178xf32> to vector<8x8xf32>
    %192 = vector.extract_strided_slice %176 {offsets = [0, 170], sizes = [8, 8], strides = [1, 1]} : vector<8x178xf32> to vector<8x8xf32>
    %193 = tpu.concatenate %177, %178, %179, %180, %181, %182, %183, %184, %185, %186, %187, %188, %189, %190, %191, %192 in 1 : vector<8x8xf32>, vector<8x8xf32>, vector<8x8xf32>, vector<8x8xf32>, vector<8x8xf32>, vector<8x8xf32>, vector<8x8xf32>, vector<8x8xf32>, vector<8x8xf32>, vector<8x8xf32>, vector<8x8xf32>, vector<8x8xf32>, vector<8x8xf32>, vector<8x8xf32>, vector<8x8xf32>, vector<8x8xf32> -> vector<8x128xf32>
    %c0_46 = arith.constant 0 : index
    %c0_47 = arith.constant 0 : index
    %c0_48 = arith.constant 0 : index
    %194 = vector.load %arg6[%c0_46, %c0_47, %c0_48] : memref<1x8x128xf32, #tpu.memory_space<vmem>>, vector<1x8x128xf32>
    %195 = vector.shape_cast %194 : vector<1x8x128xf32> to vector<8x128xf32>
    %196 = vector.shape_cast %193 : vector<8x128xf32> to vector<1x8x128xf32>
    tpu.vector_store %arg6[%c0_46, %c0_47, %c0_48], %196 {strides = array<i32>} : memref<1x8x128xf32, #tpu.memory_space<vmem>>, vector<1x8x128xf32>,
    return
  }
  func.func @transform_0(%arg0: i32) -> (i32, i32, i32) {
    %c0_i32 = arith.constant 0 : i32
    %c0_i32_0 = arith.constant 0 : i32
    %c0_i32_1 = arith.constant 0 : i32
    return %arg0, %c0_i32, %c0_i32_0 : i32, i32, i32
  }
  func.func @transform_1(%arg0: i32) -> (i32, i32) {
    %c0_i32 = arith.constant 0 : i32
    %c0_i32_0 = arith.constant 0 : i32
    %c0_i32_1 = arith.constant 0 : i32
    return %c0_i32, %c0_i32_0 : i32, i32
  }
  func.func @transform_2(%arg0: i32) -> (i32, i32) {
    %c0_i32 = arith.constant 0 : i32
    %c0_i32_0 = arith.constant 0 : i32
    %c0_i32_1 = arith.constant 0 : i32
    return %c0_i32, %c0_i32_0 : i32, i32
  }
  func.func @transform_3(%arg0: i32) -> (i32, i32) {
    %c0_i32 = arith.constant 0 : i32
    %c0_i32_0 = arith.constant 0 : i32
    %c0_i32_1 = arith.constant 0 : i32
    return %c0_i32, %c0_i32_0 : i32, i32
  }
  func.func @transform_4(%arg0: i32) -> (i32, i32) {
    %c0_i32 = arith.constant 0 : i32
    %c0_i32_0 = arith.constant 0 : i32
    %c0_i32_1 = arith.constant 0 : i32
    return %c0_i32, %c0_i32_0 : i32, i32
  }
  func.func @transform_5(%arg0: i32) -> (i32, i32, i32) {
    %c0_i32 = arith.constant 0 : i32
    %c0_i32_0 = arith.constant 0 : i32
    %c0_i32_1 = arith.constant 0 : i32
    return %arg0, %c0_i32, %c0_i32_0 : i32, i32, i32
  }
}

</mosaic_0001>

<llo_original>
// kernel: down_res_block.1
$region0: #{down_res_block.1}
  #allocation0 [shape = 'u32[]', space=smem, size = 0x4, offset = 0x4, fixed_abs, tag = 'smem constant byte address 0x4 - core index']
  #allocation1 [shape = 'u32[144,128]{1,0:T(1,128)}', space=vmem, size = 0x12000, scoped, tag = 'internal scratch']
  %s0 = inlined_call_operand.vmem [shape: f32[1,16,200], index: 0, kind: input, shape index: {}]
  %s1 = inlined_call_operand.vmem [shape: f32[16,64], index: 1, kind: input, shape index: {}]
  %s2 = inlined_call_operand.vmem [shape: f32[8,72], index: 2, kind: input, shape index: {}]
  %s3 = inlined_call_operand.vmem [shape: f32[8,5], index: 3, kind: input, shape index: {}]
  %s4 = inlined_call_operand.vmem [shape: f32[2,178], index: 4, kind: input, shape index: {}]
  %s5 = inlined_call_operand.vmem [shape: f32[1,8,128], index: 5, kind: output, shape index: {}]
  %s6 = sld [smem:[#allocation0]]
  $region30: #{down_res_block.1} parent=0
    _
  %s8 = ssub.s32 1, %s6
  %s9 = scalar_select 0, %s8, %s6
  // Predicated region
  $region2: #{down_res_block.1} parent=0 // pred_check
    _
  $region3: #{down_res_block.1} parent=0 // pred_check_branch
    %11 = sbr.rel (0) target = $region5
  $region4: #{down_res_block.1} parent=0 // pred_region
    _
  $region5: #{down_res_block.1} parent=0 // pred_fallthru
    _
  // Predicated region
  $region6: #{down_res_block.1} parent=0 // pred_check
    _
  $region7: #{down_res_block.1} parent=0 // pred_check_branch
    %13 = sbr.rel (0) target = $region9
  $region8: #{down_res_block.1} parent=0 // pred_region
    _
  $region9: #{down_res_block.1} parent=0 // pred_fallthru
    _
  // Predicated region
  $region10: #{down_res_block.1} parent=0 // pred_check
    _
  $region11: #{down_res_block.1} parent=0 // pred_check_branch
    %15 = sbr.rel (0) target = $region13
  $region12: #{down_res_block.1} parent=0 // pred_region
    _
  $region13: #{down_res_block.1} parent=0 // pred_fallthru
    _
  // Predicated region
  $region14: #{down_res_block.1} parent=0 // pred_check
    _
  $region15: #{down_res_block.1} parent=0 // pred_check_branch
    %17 = sbr.rel (0) target = $region17
  $region16: #{down_res_block.1} parent=0 // pred_region
    _
  $region17: #{down_res_block.1} parent=0 // pred_fallthru
    _
  // Predicated region
  $region18: #{down_res_block.1} parent=0 // pred_check
    _
  $region19: #{down_res_block.1} parent=0 // pred_check_branch
    %19 = sbr.rel (0) target = $region21
  $region20: #{down_res_block.1} parent=0 // pred_region
    _
  $region21: #{down_res_block.1} parent=0 // pred_fallthru
    _
  %v20 = vld [vmem:[%s0] sm:$0xff]
  %v21 = vld [vmem:[%s0 + $0x8] sm:$0xff]
  %v22 = vld [vmem:[%s0 + $0x10] sm:$0xff]
  %v23 = vld [vmem:[%s0 + $0x18] sm:$0xff]
  %v24 = vld [vmem:[%s4] sm:$0xf]
  %v25 = vld [vmem:[%s3] sm:$0xff]
  %30 = vrot.lane.b32.xlu0 %v20, 127
  %v31 = vpop.permute.xlu0 %30
  %32 = vrot.lane.b32.xlu0 %v21, 127
  %v33 = vpop.permute.xlu0 %32
  %34 = vrot.lane.b32.xlu0 %v22, 127
  %v35 = vpop.permute.xlu0 %34
  %36 = vrot.lane.b32.xlu0 %v23, 127
  %v37 = vpop.permute.xlu0 %36
  %vm38 = vcmask 1039360
  %v39 = vsel %vm38, %v31, %v33
  %v40 = vsel %vm38, %v35, %v37
  %45 = vrot.lane.b32.xlu0 %v20, 118
  %v46 = vpop.permute.xlu0 %45
  %47 = vrot.lane.b32.xlu0 %v21, 118
  %v48 = vpop.permute.xlu0 %47
  %49 = vrot.lane.b32.xlu0 %v22, 118
  %v50 = vpop.permute.xlu0 %49
  %51 = vrot.lane.b32.xlu0 %v23, 118
  %v52 = vpop.permute.xlu0 %51
  %vm53 = vcmask 965632
  %v54 = vsel %vm53, %v46, %v48
  %v55 = vsel %vm53, %v50, %v52
  %60 = vrot.lane.b32.xlu0 %v20, 117
  %v61 = vpop.permute.xlu0 %60
  %62 = vrot.lane.b32.xlu0 %v21, 117
  %v63 = vpop.permute.xlu0 %62
  %64 = vrot.lane.b32.xlu0 %v22, 117
  %v65 = vpop.permute.xlu0 %64
  %66 = vrot.lane.b32.xlu0 %v23, 117
  %v67 = vpop.permute.xlu0 %66
  %vm68 = vcmask 957440
  %v69 = vsel %vm68, %v61, %v63
  %v70 = vsel %vm68, %v65, %v67
  %v75 = vld [vmem:[%s1] sm:$0xff]
  %v76 = vld [vmem:[%s1 + $0x8] sm:$0xff]
  %vm77 = vcmask 523264
  %v79 = vsel %vm77, %v75, 0
  %v82 = vsel %vm77, %v76, 0
  %84 = vmatprep.subr.mxu0 %v21
  %85 = vmatpush1.msra.mxu0 %v20
  %86 = vmatprep.subr.mxu0 %v23
  %87 = vmatpush1.msra.mxu0 %v22
  %88 = vmatprep.subr.mxu0 %v33
  %89 = vmatpush1.msra.mxu0 %v39
  %90 = vmatprep.subr.mxu0 %v37
  %91 = vmatpush1.msra.mxu0 %v40
  %92 = vmatprep.subr.mxu0 %v48
  %93 = vmatpush1.msra.mxu0 %v54
  %94 = vmatprep.subr.mxu0 %v52
  %95 = vmatpush1.msra.mxu0 %v55
  %96 = vmatprep.subr.mxu0 %v63
  %97 = vmatpush1.msra.mxu0 %v69
  %98 = vmatprep.subr.mxu0 %v67
  %99 = vmatpush1.msra.mxu0 %v70
  %100 = vmatprep.subr.mxu0 0.0
  %101 = vmatpush1.msra.mxu0 0.0
  %102 = vmatprep.subr.mxu0 0.0
  %103 = vmatpush1.msra.mxu0 0.0
  %104 = vmatprep.subr.mxu0 0.0
  %105 = vmatpush1.msra.mxu0 0.0
  %106 = vmatprep.subr.mxu0 0.0
  %107 = vmatpush1.msra.mxu0 0.0
  %108 = vmatprep.subr.mxu0 0.0
  %109 = vmatpush1.msra.mxu0 0.0
  %110 = vmatprep.subr.mxu0 0.0
  %111 = vmatpush1.msra.mxu0 0.0
  %112 = vmatprep.subr.mxu0 0.0
  %113 = vmatpush1.msra.mxu0 0.0
  %114 = vmatprep.subr.mxu0 0.0
  %115 = vmatpush1.msra.mxu0 0.0
  %116 = vmatprep.subr.mxu0 0.0
  %117 = vmatpush1.msra.mxu0 0.0
  %118 = vmatprep.subr.mxu0 0.0
  %119 = vmatpush1.msra.mxu0 0.0
  %120 = vmatprep.subr.mxu0 0.0
  %121 = vmatpush1.msra.mxu0 0.0
  %122 = vmatprep.subr.mxu0 0.0
  %123 = vmatpush1.msra.mxu0 0.0
  %124 = vmatprep.subr.mxu0 0.0
  %125 = vmatpush1.msra.mxu0 0.0
  %126 = vmatprep.subr.mxu0 0.0
  %127 = vmatpush1.msra.mxu0 0.0
  %128 = vmatprep.subr.mxu0 0.0
  %129 = vmatpush1.msra.mxu0 0.0
  %130 = vmatprep.subr.mxu0 0.0
  %131 = vmatpush1.msra.mxu0 0.0
  %132 = vmatprep.subr.mxu0 0.0
  %133 = vmatpush1.msra.mxu0 0.0
  %134 = vmatprep.subr.mxu0 0.0
  %135 = vmatpush1.msra.mxu0 0.0
  %136 = vmatprep.subr.mxu0 0.0
  %137 = vmatpush1.msra.mxu0 0.0
  %138 = vmatprep.subr.mxu0 0.0
  %139 = vmatpush1.msra.mxu0 0.0
  %140 = vmatprep.subr.mxu0 0.0
  %141 = vmatpush1.msra.mxu0 0.0
  %142 = vmatprep.subr.mxu0 0.0
  %143 = vmatpush1.msra.mxu0 0.0
  %144 = vmatprep.subr.mxu0 0.0
  %145 = vmatpush1.msra.mxu0 0.0
  %146 = vmatprep.subr.mxu0 0.0
  %147 = vmatpush1.msra.mxu0 0.0
  %148 = vmatprep.mubr.f32.mxu0 0.0
  %149 = vmatmul.mubr.f32.gmra.mrb[0].mxu0 %v79
  %v150 = vpop.f32.mrb[0].mxu0
  %v151 = vadd.f32 0.0, %v150
  %v152 = vpop.f32.mrb[0].mxu0
  %v153 = vadd.f32 0.0, %v152
  %154 = vmatprep.mubr.f32.mxu0 0.0
  %155 = vmatmul.mubr.f32.gmra.mrb[0].mxu0 %v82
  %v156 = vpop.f32.mrb[0].mxu0
  %v157 = vadd.f32 0.0, %v156
  %v158 = vpop.f32.mrb[0].mxu0
  %v159 = vadd.f32 0.0, %v158
  %160 = vdwg.mxu0
  %v162 = vlaneseq
  %v163 = vshrl.u32 %v162, 7
  %v164 = vsub.s32 0, %v163
  %v165 = vrot.slane %v24, %v164
  %v166 = vlaneseq
  %v167 = vshrl.u32 %v166, 7
  %v168 = vsub.s32 2, %v167
  %v169 = vrot.slane %v24, %v168
  %v172 = vlaneseq
  %v173 = vshrl.u32 %v172, 7
  %v174 = vsub.s32 0, %v173
  %v175 = vrot.slane %v165, %v174
  %v176 = vlaneseq
  %v177 = vshrl.u32 %v176, 7
  %v178 = vsub.s32 0, %v177
  %v179 = vrot.slane %v169, %v178
  %v180 = vmul.f32 %v151, %v175
  %v181 = vmul.f32 %v153, %v179
  %vm182 = vcmask 408576
  %v183 = vsel %vm182, %v181, 0.0
  %v184 = vadd.f32 %v180, %v183
  %185 = vadd.xlane.f32.xlu0 %v184
  %v186 = vpop.xlane.xlu0 %185
  %v187 = vmul.f32 %v186, 0.015625
  %v188 = vsub.f32 %v151, %v187
  %v189 = vsub.f32 %v153, %v187
  %v190 = vmul.f32 %v188, %v188
  %v191 = vmul.f32 %v189, %v189
  %v192 = vmul.f32 %v190, %v175
  %v193 = vmul.f32 %v191, %v179
  %v194 = vsel %vm182, %v193, 0.0
  %v195 = vadd.f32 %v192, %v194
  %196 = vadd.xlane.f32.xlu0 %v195
  %v197 = vpop.xlane.xlu0 %196
  %v198 = vmul.f32 %v197, 0.015625
  %v199 = vadd.f32 %v198, 1e-05
  %v200 = vrsqrt.pop %v199
  %v201 = vmul.f32 %v25, %v200
  %v202 = vmul.f32 %v187, %v201
  %204 = vrot.lane.b32.xlu0 %v202, 1
  %v205 = vpop.permute.xlu0 %204
  %v207 = vsub.f32 %v25, %v205
  %209 = vset.pattern.permute.xlu0 0
  %210 = vperm.xlu0 %209, %v201
  %v211 = vpop.permute.xlu0 %210
  %v213 = vmul.f32 %v211, %v175
  %v214 = vmul.f32 %v211, %v179
  %v215 = vadd.f32 %v213, 0.0
  %v216 = vadd.f32 %v214, 0.0
  %218 = vset.pattern.permute.xlu0 1
  %219 = vperm.xlu0 %218, %v207
  %v220 = vpop.permute.xlu0 %219
  %v222 = vmul.f32 %v220, %v175
  %v223 = vmul.f32 %v220, %v179
  %v224 = vadd.f32 %v222, 0.0
  %v225 = vadd.f32 %v223, 0.0
  %v226 = vlaneseq
  %v227 = vshrl.u32 %v226, 7
  %v228 = vsub.s32 1, %v227
  %v229 = vrot.slane %v24, %v228
  %v230 = vlaneseq
  %v231 = vshrl.u32 %v230, 7
  %v232 = vsub.s32 3, %v231
  %v233 = vrot.slane %v24, %v232
  %v236 = vlaneseq
  %v237 = vshrl.u32 %v236, 7
  %v238 = vsub.s32 1, %v237
  %v239 = vrot.slane %v229, %v238
  %v240 = vlaneseq
  %v241 = vshrl.u32 %v240, 7
  %v242 = vsub.s32 1, %v241
  %v243 = vrot.slane %v233, %v242
  %v244 = vmul.f32 %v151, %v239
  %v245 = vmul.f32 %v153, %v243
  %v246 = vsel %vm182, %v245, 0.0
  %v247 = vadd.f32 %v244, %v246
  %248 = vadd.xlane.f32.xlu0 %v247
  %v249 = vpop.xlane.xlu0 %248
  %v250 = vmul.f32 %v249, 0.015625
  %v251 = vsub.f32 %v151, %v250
  %v252 = vsub.f32 %v153, %v250
  %v253 = vmul.f32 %v251, %v251
  %v254 = vmul.f32 %v252, %v252
  %v255 = vmul.f32 %v253, %v239
  %v256 = vmul.f32 %v254, %v243
  %v257 = vsel %vm182, %v256, 0.0
  %v258 = vadd.f32 %v255, %v257
  %259 = vadd.xlane.f32.xlu0 %v258
  %v260 = vpop.xlane.xlu0 %259
  %v261 = vmul.f32 %v260, 0.015625
  %v262 = vadd.f32 %v261, 1e-05
  %v263 = vrsqrt.pop %v262
  %v264 = vmul.f32 %v25, %v263
  %v265 = vmul.f32 %v250, %v264
  %267 = vrot.lane.b32.xlu0 %v265, 1
  %v268 = vpop.permute.xlu0 %267
  %v270 = vsub.f32 %v25, %v268
  %272 = vset.pattern.permute.xlu0 0
  %273 = vperm.xlu0 %272, %v264
  %v274 = vpop.permute.xlu0 %273
  %v276 = vmul.f32 %v274, %v239
  %v277 = vmul.f32 %v274, %v243
  %v278 = vadd.f32 %v215, %v276
  %v279 = vadd.f32 %v216, %v277
  %281 = vset.pattern.permute.xlu0 1
  %282 = vperm.xlu0 %281, %v270
  %v283 = vpop.permute.xlu0 %282
  %v285 = vmul.f32 %v283, %v239
  %v286 = vmul.f32 %v283, %v243
  %v287 = vadd.f32 %v224, %v285
  %v288 = vadd.f32 %v225, %v286
  %v289 = vmul.f32 %v151, %v278
  %v290 = vmul.f32 %v153, %v279
  %v291 = vadd.f32 %v289, %v287
  %v292 = vadd.f32 %v290, %v288
  %vm293 = vcmp.ge.f32.partialorder %v291, 0.0
  %vm294 = vcmp.ge.f32.partialorder %v292, 0.0
  %v295 = vmul.f32 %v291, 0.2
  %v296 = vmul.f32 %v292, 0.2
  %v297 = vsel %vm293, %v291, %v295
  %v298 = vsel %vm294, %v292, %v296
  %301 = vrot.lane.b32.xlu0 %v297, 11
  %v302 = vpop.permute.xlu0 %301
  %303 = vrot.lane.b32.xlu0 %v298, 11
  %v304 = vpop.permute.xlu0 %303
  %vm305 = vcmask 89088
  %v306 = vsel %vm305, %v302, %v304
  %v309 = vsel %vm305, 0.0, %v302
  %vm310 = vcmask 498688
  %v311 = vsel %vm310, %v306, 0.0
  %314 = vrot.lane.b32.xlu0 %v309, 127
  %v315 = vpop.permute.xlu0 %314
  %316 = vrot.lane.b32.xlu0 %v311, 127
  %v317 = vpop.permute.xlu0 %316
  %v318 = vsel %vm38, %v315, %v317
  %321 = vrot.lane.b32.xlu0 %v309, 126
  %v322 = vpop.permute.xlu0 %321
  %323 = vrot.lane.b32.xlu0 %v311, 126
  %v324 = vpop.permute.xlu0 %323
  %vm325 = vcmask 1031168
  %v326 = vsel %vm325, %v322, %v324
  %329 = vrot.lane.b32.xlu0 %v309, 118
  %v330 = vpop.permute.xlu0 %329
  %331 = vrot.lane.b32.xlu0 %v311, 118
  %v332 = vpop.permute.xlu0 %331
  %v333 = vsel %vm53, %v330, %v332
  %336 = vrot.lane.b32.xlu0 %v309, 117
  %v337 = vpop.permute.xlu0 %336
  %338 = vrot.lane.b32.xlu0 %v311, 117
  %v339 = vpop.permute.xlu0 %338
  %v340 = vsel %vm68, %v337, %v339
  %343 = vrot.lane.b32.xlu0 %v309, 116
  %v344 = vpop.permute.xlu0 %343
  %345 = vrot.lane.b32.xlu0 %v311, 116
  %v346 = vpop.permute.xlu0 %345
  %vm347 = vcmask 949248
  %v348 = vsel %vm347, %v344, %v346
  %351 = vrot.lane.b32.xlu0 %v309, 108
  %v352 = vpop.permute.xlu0 %351
  %353 = vrot.lane.b32.xlu0 %v311, 108
  %v354 = vpop.permute.xlu0 %353
  %vm355 = vcmask 883712
  %v356 = vsel %vm355, %v352, %v354
  %359 = vrot.lane.b32.xlu0 %v309, 107
  %v360 = vpop.permute.xlu0 %359
  %361 = vrot.lane.b32.xlu0 %v311, 107
  %v362 = vpop.permute.xlu0 %361
  %vm363 = vcmask 875520
  %v364 = vsel %vm363, %v360, %v362
  %367 = vrot.lane.b32.xlu0 %v309, 106
  %v368 = vpop.permute.xlu0 %367
  %369 = vrot.lane.b32.xlu0 %v311, 106
  %v370 = vpop.permute.xlu0 %369
  %vm371 = vcmask 867328
  %v372 = vsel %vm371, %v368, %v370
  %v375 = vld [vmem:[%s2] sm:$0xff]
  %vm376 = vcmask 588800
  %v378 = vsel %vm376, %v375, 0
  %380 = vmatprep.subr.mxu0 %v311
  %381 = vmatpush1.msra.mxu0 %v309
  %382 = vmatprep.subr.mxu0 %v317
  %383 = vmatpush1.msra.mxu0 %v318
  %384 = vmatprep.subr.mxu0 %v324
  %385 = vmatpush1.msra.mxu0 %v326
  %386 = vmatprep.subr.mxu0 %v332
  %387 = vmatpush1.msra.mxu0 %v333
  %388 = vmatprep.subr.mxu0 %v339
  %389 = vmatpush1.msra.mxu0 %v340
  %390 = vmatprep.subr.mxu0 %v346
  %391 = vmatpush1.msra.mxu0 %v348
  %392 = vmatprep.subr.mxu0 %v354
  %393 = vmatpush1.msra.mxu0 %v356
  %394 = vmatprep.subr.mxu0 %v362
  %395 = vmatpush1.msra.mxu0 %v364
  %396 = vmatprep.subr.mxu0 %v370
  %397 = vmatpush1.msra.mxu0 %v372
  %398 = vmatprep.subr.mxu0 0.0
  %399 = vmatpush1.msra.mxu0 0.0
  %400 = vmatprep.subr.mxu0 0.0
  %401 = vmatpush1.msra.mxu0 0.0
  %402 = vmatprep.subr.mxu0 0.0
  %403 = vmatpush1.msra.mxu0 0.0
  %404 = vmatprep.subr.mxu0 0.0
  %405 = vmatpush1.msra.mxu0 0.0
  %406 = vmatprep.subr.mxu0 0.0
  %407 = vmatpush1.msra.mxu0 0.0
  %408 = vmatprep.subr.mxu0 0.0
  %409 = vmatpush1.msra.mxu0 0.0
  %410 = vmatprep.subr.mxu0 0.0
  %411 = vmatpush1.msra.mxu0 0.0
  %412 = vmatprep.subr.mxu0 0.0
  %413 = vmatpush1.msra.mxu0 0.0
  %414 = vmatprep.subr.mxu0 0.0
  %415 = vmatpush1.msra.mxu0 0.0
  %416 = vmatprep.subr.mxu0 0.0
  %417 = vmatpush1.msra.mxu0 0.0
  %418 = vmatprep.subr.mxu0 0.0
  %419 = vmatpush1.msra.mxu0 0.0
  %420 = vmatprep.subr.mxu0 0.0
  %421 = vmatpush1.msra.mxu0 0.0
  %422 = vmatprep.subr.mxu0 0.0
  %423 = vmatpush1.msra.mxu0 0.0
  %424 = vmatprep.subr.mxu0 0.0
  %425 = vmatpush1.msra.mxu0 0.0
  %426 = vmatprep.subr.mxu0 0.0
  %427 = vmatpush1.msra.mxu0 0.0
  %428 = vmatprep.subr.mxu0 0.0
  %429 = vmatpush1.msra.mxu0 0.0
  %430 = vmatprep.subr.mxu0 0.0
  %431 = vmatpush1.msra.mxu0 0.0
  %432 = vmatprep.subr.mxu0 0.0
  %433 = vmatpush1.msra.mxu0 0.0
  %434 = vmatprep.subr.mxu0 0.0
  %435 = vmatpush1.msra.mxu0 0.0
  %436 = vmatprep.subr.mxu0 0.0
  %437 = vmatpush1.msra.mxu0 0.0
  %438 = vmatprep.subr.mxu0 0.0
  %439 = vmatpush1.msra.mxu0 0.0
  %440 = vmatprep.subr.mxu0 0.0
  %441 = vmatpush1.msra.mxu0 0.0
  %442 = vmatprep.subr.mxu0 0.0
  %443 = vmatpush1.msra.mxu0 0.0
  %444 = vmatprep.mubr.f32.mxu0 0.0
  %445 = vmatmul.mubr.f32.gmra.mrb[0].mxu0 %v378
  %v446 = vpop.f32.mrb[0].mxu0
  %v447 = vadd.f32 0.0, %v446
  %v448 = vpop.f32.mrb[0].mxu0
  %v449 = vadd.f32 0.0, %v448
  %450 = vdwg.mxu0
  %v451 = vmul.f32 %v447, %v175
  %v452 = vmul.f32 %v449, %v179
  %v453 = vsel %vm182, %v452, 0.0
  %v454 = vadd.f32 %v451, %v453
  %455 = vadd.xlane.f32.xlu0 %v454
  %v456 = vpop.xlane.xlu0 %455
  %v457 = vmul.f32 %v456, 0.015625
  %v458 = vsub.f32 %v447, %v457
  %v459 = vsub.f32 %v449, %v457
  %v460 = vmul.f32 %v458, %v458
  %v461 = vmul.f32 %v459, %v459
  %v462 = vmul.f32 %v460, %v175
  %v463 = vmul.f32 %v461, %v179
  %v464 = vsel %vm182, %v463, 0.0
  %v465 = vadd.f32 %v462, %v464
  %466 = vadd.xlane.f32.xlu0 %v465
  %v467 = vpop.xlane.xlu0 %466
  %v468 = vmul.f32 %v467, 0.015625
  %v469 = vadd.f32 %v468, 1e-05
  %v470 = vrsqrt.pop %v469
  %v471 = vmul.f32 %v25, %v470
  %v472 = vmul.f32 %v457, %v471
  %474 = vrot.lane.b32.xlu0 %v472, 1
  %v475 = vpop.permute.xlu0 %474
  %v477 = vsub.f32 %v25, %v475
  %479 = vset.pattern.permute.xlu0 2
  %480 = vperm.xlu0 %479, %v471
  %v481 = vpop.permute.xlu0 %480
  %v483 = vmul.f32 %v481, %v175
  %v484 = vmul.f32 %v481, %v179
  %v485 = vadd.f32 %v483, 0.0
  %v486 = vadd.f32 %v484, 0.0
  %488 = vset.pattern.permute.xlu0 3
  %489 = vperm.xlu0 %488, %v477
  %v490 = vpop.permute.xlu0 %489
  %v492 = vmul.f32 %v490, %v175
  %v493 = vmul.f32 %v490, %v179
  %v494 = vadd.f32 %v492, 0.0
  %v495 = vadd.f32 %v493, 0.0
  %v496 = vmul.f32 %v447, %v239
  %v497 = vmul.f32 %v449, %v243
  %v498 = vsel %vm182, %v497, 0.0
  %v499 = vadd.f32 %v496, %v498
  %500 = vadd.xlane.f32.xlu0 %v499
  %v501 = vpop.xlane.xlu0 %500
  %v502 = vmul.f32 %v501, 0.015625
  %v503 = vsub.f32 %v447, %v502
  %v504 = vsub.f32 %v449, %v502
  %v505 = vmul.f32 %v503, %v503
  %v506 = vmul.f32 %v504, %v504
  %v507 = vmul.f32 %v505, %v239
  %v508 = vmul.f32 %v506, %v243
  %v509 = vsel %vm182, %v508, 0.0
  %v510 = vadd.f32 %v507, %v509
  %511 = vadd.xlane.f32.xlu0 %v510
  %v512 = vpop.xlane.xlu0 %511
  %v513 = vmul.f32 %v512, 0.015625
  %v514 = vadd.f32 %v513, 1e-05
  %v515 = vrsqrt.pop %v514
  %v516 = vmul.f32 %v25, %v515
  %v517 = vmul.f32 %v502, %v516
  %519 = vrot.lane.b32.xlu0 %v517, 1
  %v520 = vpop.permute.xlu0 %519
  %v522 = vsub.f32 %v25, %v520
  %524 = vset.pattern.permute.xlu0 2
  %525 = vperm.xlu0 %524, %v516
  %v526 = vpop.permute.xlu0 %525
  %v528 = vmul.f32 %v526, %v239
  %v529 = vmul.f32 %v526, %v243
  %v530 = vadd.f32 %v485, %v528
  %v531 = vadd.f32 %v486, %v529
  %533 = vset.pattern.permute.xlu0 3
  %534 = vperm.xlu0 %533, %v522
  %v535 = vpop.permute.xlu0 %534
  %v537 = vmul.f32 %v535, %v239
  %v538 = vmul.f32 %v535, %v243
  %v539 = vadd.f32 %v494, %v537
  %v540 = vadd.f32 %v495, %v538
  %v541 = vmul.f32 %v447, %v530
  %v542 = vmul.f32 %v449, %v531
  %v543 = vadd.f32 %v541, %v539
  %v544 = vadd.f32 %v542, %v540
  %vm545 = vcmp.ge.f32.partialorder %v543, 0.0
  %vm546 = vcmp.ge.f32.partialorder %v544, 0.0
  %v547 = vmul.f32 %v543, 0.2
  %v548 = vmul.f32 %v544, 0.2
  %v549 = vsel %vm545, %v543, %v547
  %v550 = vsel %vm546, %v544, %v548
  %552 = vset.pattern.permute.xlu0 4
  %553 = vperm.xlu0 %552, %v25
  %v554 = vpop.permute.xlu0 %553
  %v556 = vadd.f32 %v157, %v554
  %v557 = vadd.f32 %v159, %v554
  %vm558 = vcmp.ge.f32.partialorder %v556, 0.0
  %vm559 = vcmp.ge.f32.partialorder %v557, 0.0
  %v560 = vmul.f32 %v556, 0.2
  %v561 = vmul.f32 %v557, 0.2
  %v562 = vsel %vm558, %v556, %v560
  %v563 = vsel %vm559, %v557, %v561
  %v564 = vadd.f32 %v549, %v562
  %v565 = vadd.f32 %v550, %v563
  %567 = vrot.lane.b32.xlu0 %v564, 126
  %v568 = vpop.permute.xlu0 %567
  %570 = vrot.lane.b32.xlu0 %v564, 124
  %v571 = vpop.permute.xlu0 %570
  %573 = vrot.lane.b32.xlu0 %v564, 122
  %v574 = vpop.permute.xlu0 %573
  %576 = vrot.lane.b32.xlu0 %v564, 120
  %v577 = vpop.permute.xlu0 %576
  %579 = vrot.lane.b32.xlu0 %v564, 118
  %v580 = vpop.permute.xlu0 %579
  %582 = vrot.lane.b32.xlu0 %v564, 116
  %v583 = vpop.permute.xlu0 %582
  %585 = vrot.lane.b32.xlu0 %v564, 114
  %v586 = vpop.permute.xlu0 %585
  %588 = vrot.lane.b32.xlu0 %v564, 92
  %v589 = vpop.permute.xlu0 %588
  %591 = vrot.lane.b32.xlu0 %v564, 90
  %v592 = vpop.permute.xlu0 %591
  %594 = vrot.lane.b32.xlu0 %v564, 88
  %v595 = vpop.permute.xlu0 %594
  %598 = vrot.lane.b32.xlu0 %v565, 86
  %v599 = vpop.permute.xlu0 %598
  %601 = vrot.lane.b32.xlu0 %v565, 84
  %v602 = vpop.permute.xlu0 %601
  %604 = vrot.lane.b32.xlu0 %v565, 82
  %v605 = vpop.permute.xlu0 %604
  %607 = vrot.lane.b32.xlu0 %v565, 80
  %v608 = vpop.permute.xlu0 %607
  %610 = vrot.lane.b32.xlu0 %v565, 78
  %v611 = vpop.permute.xlu0 %610
  %vm613 = vcmask 64512
  %v614 = vsel %vm613, %v564, %v568
  %vm615 = vcmask 130048
  %v616 = vsel %vm615, %v614, %v571
  %vm617 = vcmask 195584
  %v618 = vsel %vm617, %v616, %v574
  %vm619 = vcmask 261120
  %v620 = vsel %vm619, %v618, %v577
  %vm621 = vcmask 326656
  %v622 = vsel %vm621, %v620, %v580
  %vm623 = vcmask 392192
  %v624 = vsel %vm623, %v622, %v583
  %vm625 = vcmask 457728
  %v626 = vsel %vm625, %v624, %v586
  %v627 = vsel %vm77, %v626, %v589
  %v628 = vsel %vm376, %v627, %v592
  %vm629 = vcmask 654336
  %v630 = vsel %vm629, %v628, %v595
  %vm631 = vcmask 719872
  %v632 = vsel %vm631, %v630, %v599
  %vm633 = vcmask 785408
  %v634 = vsel %vm633, %v632, %v602
  %vm635 = vcmask 850944
  %v636 = vsel %vm635, %v634, %v605
  %vm637 = vcmask 916480
  %v638 = vsel %vm637, %v636, %v608
  %vm639 = vcmask 982016
  %v640 = vsel %vm639, %v638, %v611
  %641 = vst [vmem:[%s5] sm:$0xff] %v640
  // Predicated region
  $region22: #{down_res_block.1} parent=0 // pred_check
    _
  $region23: #{down_res_block.1} parent=0 // pred_check_branch
    %643 = sbr.rel (0) target = $region25
  $region24: #{down_res_block.1} parent=0 // pred_region
    _
  $region25: #{down_res_block.1} parent=0 // pred_fallthru
    _
  // Predicated region
  $region26: #{down_res_block.1} parent=0 // pred_check
    _
  $region27: #{down_res_block.1} parent=0 // pred_check_branch
    %645 = sbr.rel (0) target = $region29
  $region28: #{down_res_block.1} parent=0 // pred_region
    _
  $region29: #{down_res_block.1} parent=0 // pred_fallthru
    _

</llo_original>
